<compile_context>
chip_gen: v5e
topology: v5e:2x2
jax: 0.10.0
libtpu: 0.0.40
codegen_flags: <defaults>
</compile_context>

<pallas_src>
import functools
import math

import jax
import jax.numpy as jnp
from jax.experimental import pallas as pl
from jax.experimental.pallas import tpu as pltpu


def _head_kernel(x_ref, e_ref, mod_ref, w_ref, b_ref, o_ref, *, eps):
    # x_ref  : (TR, C) tile of flattened [B*L, C] input (any float dtype)
    # e_ref  : (TR, C) tile of the f32 conditioning signal
    # mod_ref: (2, C)  resident f32 table: row0 = modulation[0] (shift),
    #                                      row1 = 1 + modulation[1] (scale, pre-folded)
    # w_ref  : (C, N)  resident head weight (f32, [in, out] layout)
    # b_ref  : (1, N)  resident head bias (f32)
    # o_ref  : (TR, N) f32 output tile
    x32 = x_ref[...].astype(jnp.float32)                          # x.float()
    # Independent cross-lane reductions (overlap on the XLU instead of
    # serializing var behind mu); biased variance as in nn.LayerNorm.
    mu = jnp.mean(x32, axis=-1, keepdims=True)
    ms = jnp.mean(x32 * x32, axis=-1, keepdims=True)
    var = ms - mu * mu
    normed = ((x32 - mu) * jax.lax.rsqrt(var + eps)).astype(x_ref.dtype)  # .type_as(x)

    e32 = e_ref[...]                                               # f32 by contract
    shift = mod_ref[0:1, :] + e32                                  # e[0]
    scale1 = mod_ref[1:2, :] + e32                                 # 1 + e[1] (1 folded in)
    y = normed.astype(jnp.float32) * scale1 + shift                # autocast(f32)

    o_ref[...] = (jnp.dot(y, w_ref[...], preferred_element_type=jnp.float32)
                  + b_ref[...]).astype(o_ref.dtype)


def _min_sublane_rows(dtype):
    # Minimum row tile so rows pack full vregs: 8 (f32), 16 (bf16), 32 (int8/fp8).
    return {4: 8, 2: 16, 1: 32}.get(jnp.dtype(dtype).itemsize, 8)


def _vmem_budget_bytes():
    """(working-set budget, physical VMEM capacity) for tile sizing."""
    try:
        cap = pltpu.get_tpu_info().vmem_capacity_bytes
    except Exception:
        cap = 64 * 1024 * 1024  # conservative fallback (v7x per-TC VMEM)
    if cap <= 64 * 1024 * 1024:
        budget = cap // 2                                   # v7x: room for internal scratch
    else:
        budget = min(int(cap * 3 // 4), 96 * 1024 * 1024)   # v5e/v6e (128 MiB)
    return budget, cap


def _bytes_per_row(C, N, itemsize):
    # Streamed I/O per row (x + e in, out), double-buffered by the pipeline,
    # plus in-kernel f32 temporaries (~4 live TRxC f32 tiles: x32/normed/scale/y).
    return (C * itemsize + 4 * C + 4 * N) * 2 + 16 * C


def _resident_bytes(C, N):
    # Resident f32 operands (weight, bias, modulation), double-buffered.
    return (C * N + N + 2 * C) * 4 * 2


def _pick_tile_rows(rows, C, N, x_dtype, budget_bytes):
    itemsize = jnp.dtype(x_dtype).itemsize
    min_rows = _min_sublane_rows(x_dtype)
    per_row = _bytes_per_row(C, N, itemsize)
    avail = max(budget_bytes - _resident_bytes(C, N), per_row * min_rows)
    tr = (avail // per_row) // min_rows * min_rows
    tr = int(max(min_rows, min(tr, 512)))       # roofline flattens past ~512 rows
    rows_ceil = pl.cdiv(rows, min_rows) * min_rows
    tr = min(tr, rows_ceil)
    # Target >= 8 grid steps (>= 4 per TensorCore on megacore parts) so the
    # double-buffered pipeline has tiles to prefetch against; fall back to
    # >= 2 steps for small problems.
    for target in (8, 2):
        if rows_ceil >= target * min_rows:
            cap = (rows_ceil // target) // min_rows * min_rows
            tr = min(tr, max(min_rows, cap))
            break
    return tr


def wan_head(x, e, modulation, w, b, eps=1e-6, *, tile_rows=None):
    """x: [B, L, C] (any float dtype), e: [B, L, C] float32,
    modulation: [1, 2, C] f32, w: [C, N] f32 ([in, out] layout), b: [N] f32.
    Returns [B, L, N] float32 (matches torch autocast-f32 output)."""
    B, L, C = x.shape
    N = w.shape[-1]
    assert e.shape == (B, L, C)
    assert e.dtype == jnp.float32, "e must be float32 (mirrors the torch assert)"
    rows = B * L

    budget, vmem_cap = _vmem_budget_bytes()
    min_rows = _min_sublane_rows(x.dtype)
    if tile_rows is None:
        tile_rows = _pick_tile_rows(rows, C, N, x.dtype, budget)
    else:
        tile_rows = max(min_rows, pl.cdiv(int(tile_rows), min_rows) * min_rows)
        tile_rows = min(tile_rows, pl.cdiv(rows, min_rows) * min_rows)

    mod = modulation.reshape(2, C).astype(jnp.float32)
    # Fold the "+1" of (1 + e[1]) into the resident scale row.
    mod2d = jnp.stack([mod[0], 1.0 + mod[1]], axis=0)
    w2d = w.reshape(C, N).astype(jnp.float32)
    b2d = b.reshape(1, N).astype(jnp.float32)

    x2d = x.reshape(rows, C)
    e2d = e.reshape(rows, C)
    num_steps = pl.cdiv(rows, tile_rows)   # ragged last block is masked by Pallas

    # Scoped-VMEM limit from the honest footprint (I/O double buffers + in-kernel
    # f32 temporaries + resident operands + slack), kept well below physical VMEM.
    itemsize = jnp.dtype(x.dtype).itemsize
    needed = (tile_rows * _bytes_per_row(C, N, itemsize)
              + _resident_bytes(C, N) + (4 << 20))
    vmem_limit = int(min(max(needed, 32 * 1024 * 1024),
                         vmem_cap - (16 << 20)))

    kernel = functools.partial(_head_kernel, eps=eps)
    out2d = pl.pallas_call(
        kernel,
        out_shape=jax.ShapeDtypeStruct((rows, N), jnp.float32),
        grid_spec=pltpu.PrefetchScalarGridSpec(
            num_scalar_prefetch=0,
            grid=(num_steps,),
            in_specs=[
                pl.BlockSpec((tile_rows, C), lambda i: (i, 0)),  # x tile
                pl.BlockSpec((tile_rows, C), lambda i: (i, 0)),  # e tile
                pl.BlockSpec((2, C), lambda i: (0, 0)),          # modulation (resident)
                pl.BlockSpec((C, N), lambda i: (0, 0)),          # head weight (resident)
                pl.BlockSpec((1, N), lambda i: (0, 0)),          # head bias (resident)
            ],
            out_specs=pl.BlockSpec((tile_rows, N), lambda i: (i, 0)),
        ),
        compiler_params=pltpu.CompilerParams(
            dimension_semantics=("parallel",),
            vmem_limit_bytes=vmem_limit,
        ),
    )(x2d, e2d, mod2d, w2d, b2d)
    return out2d.reshape(B, L, N)


def wan_head_ref(x, e, modulation, w, b, eps=1e-6):
    """Pure-JAX reference of Head.forward."""
    x32 = x.astype(jnp.float32)
    mu = x32.mean(-1, keepdims=True)
    xc = x32 - mu
    var = (xc * xc).mean(-1, keepdims=True)
    normed = (xc * jax.lax.rsqrt(var + eps)).astype(x.dtype)
    em = modulation[None] + e[:, :, None, :]          # [B, L, 2, C]
    shift, scale = em[:, :, 0, :], em[:, :, 1, :]
    y = normed.astype(jnp.float32) * (1.0 + scale) + shift
    return jnp.einsum("blc,cn->bln", y, w,
                      precision=jax.lax.Precision.HIGHEST) + b


if __name__ == "__main__":
    B, L = 2, 16
    dim = 128
    out_dim = 4
    patch_size = (1, 2, 2)
    N = math.prod(patch_size) * out_dim  # 16
    eps = 1e-6

    key = jax.random.PRNGKey(0)
    kx, ke, km, kw, kb = jax.random.split(key, 5)
    x = jax.random.normal(kx, (B, L, dim), dtype=jnp.float32)
    e = jax.random.normal(ke, (B, L, dim), dtype=jnp.float32)
    # nn.Parameter(torch.randn(1, 2, dim) / dim**0.5)
    modulation = jax.random.normal(km, (1, 2, dim), dtype=jnp.float32) / dim ** 0.5
    # nn.Linear(dim, N): weight stored here as [in, out], bias [out]
    bound = 1.0 / dim ** 0.5
    w = jax.random.uniform(kw, (dim, N), jnp.float32, -bound, bound)
    b = jax.random.uniform(kb, (N,), jnp.float32, -bound, bound)

    out = wan_head(x, e, modulation, w, b, eps=eps)
    out = jax.block_until_ready(out)

    ref = wan_head_ref(x, e, modulation, w, b, eps=eps)
    assert out.shape == (B, L, N)
    # Tolerance leaves slack for MXU f32-pass rounding vs. the XLA reference.
    assert jnp.allclose(out, ref, atol=5e-3, rtol=5e-3), \
        float(jnp.max(jnp.abs(out - ref)))
    print("KERNEL_OK")
</pallas_src>

<mosaic_0001>
module attributes {stable_mosaic.version = 11 : i64} {
  func.func @_head_kernel(%arg0: i32, %arg1: memref<16x128xf32, #tpu.memory_space<vmem>>, %arg2: memref<16x128xf32, #tpu.memory_space<vmem>>, %arg3: memref<2x128xf32, #tpu.memory_space<vmem>>, %arg4: memref<128x16xf32, #tpu.memory_space<vmem>>, %arg5: memref<1x16xf32, #tpu.memory_space<vmem>>, %arg6: memref<16x16xf32, #tpu.memory_space<vmem>>) attributes {dimension_semantics = [#tpu.dimension_semantics<parallel>], iteration_bounds = array<i64: 2>, scalar_prefetch = 0 : i64, scratch_operands = 0 : i64, tpu.core_type = #tpu.core_type<tc>, window_params = [{transform_indices = @transform_0, window_bounds = array<i64: 16, 128>}, {transform_indices = @transform_1, window_bounds = array<i64: 16, 128>}, {pipeline_mode = #tpu.pipeline_mode<synchronous>, transform_indices = @transform_2, window_bounds = array<i64: 2, 128>}, {pipeline_mode = #tpu.pipeline_mode<synchronous>, transform_indices = @transform_3, window_bounds = array<i64: 128, 16>}, {pipeline_mode = #tpu.pipeline_mode<synchronous>, transform_indices = @transform_4, window_bounds = array<i64: 1, 16>}, {transform_indices = @transform_5, window_bounds = array<i64: 16, 16>}]} {
    %c0 = arith.constant 0 : index
    %c0_0 = arith.constant 0 : index
    %0 = vector.load %arg1[%c0, %c0_0] : memref<16x128xf32, #tpu.memory_space<vmem>>, vector<16x128xf32>
    %cst = arith.constant dense<0.000000e+00> : vector<16xf32>
    %1 = vector.multi_reduction <add>, %0, %cst [1] : vector<16x128xf32> to vector<16xf32>
    %2 = vector.shape_cast %1 : vector<16xf32> to vector<16x1xf32>
    %cst_1 = arith.constant 1.280000e+02 : f32
    %3 = vector.broadcast %cst_1 : f32 to vector<16x1xf32>
    %4 = arith.divf %2, %3 : vector<16x1xf32>
    %5 = arith.mulf %0, %0 : vector<16x128xf32>
    %cst_2 = arith.constant dense<0.000000e+00> : vector<16xf32>
    %6 = vector.multi_reduction <add>, %5, %cst_2 [1] : vector<16x128xf32> to vector<16xf32>
    %7 = vector.shape_cast %6 : vector<16xf32> to vector<16x1xf32>
    %cst_3 = arith.constant 1.280000e+02 : f32
    %8 = vector.broadcast %cst_3 : f32 to vector<16x1xf32>
    %9 = arith.divf %7, %8 : vector<16x1xf32>
    %10 = arith.mulf %4, %4 : vector<16x1xf32>
    %11 = arith.subf %9, %10 : vector<16x1xf32>
    %12 = vector.broadcast %4 : vector<16x1xf32> to vector<16x128xf32>
    %13 = arith.subf %0, %12 : vector<16x128xf32>
    %cst_4 = arith.constant 9.99999997E-7 : f32
    %14 = vector.broadcast %cst_4 : f32 to vector<16x1xf32>
    %15 = arith.addf %11, %14 : vector<16x1xf32>
    %16 = math.rsqrt %15 : vector<16x1xf32>
    %17 = vector.broadcast %16 : vector<16x1xf32> to vector<16x128xf32>
    %18 = arith.mulf %13, %17 : vector<16x128xf32>
    %c0_5 = arith.constant 0 : index
    %c0_6 = arith.constant 0 : index
    %19 = vector.load %arg2[%c0_5, %c0_6] : memref<16x128xf32, #tpu.memory_space<vmem>>, vector<16x128xf32>
    %c0_7 = arith.constant 0 : index
    %c0_8 = arith.constant 0 : index
    %20 = vector.load %arg3[%c0_7, %c0_8] : memref<2x128xf32, #tpu.memory_space<vmem>>, vector<1x128xf32>
    %21 = vector.broadcast %20 : vector<1x128xf32> to vector<16x128xf32>
    %22 = arith.addf %21, %19 : vector<16x128xf32>
    %c1 = arith.constant 1 : index
    %c0_9 = arith.constant 0 : index
    %23 = vector.load %arg3[%c1, %c0_9] : memref<2x128xf32, #tpu.memory_space<vmem>>, vector<1x128xf32>
    %24 = vector.broadcast %23 : vector<1x128xf32> to vector<16x128xf32>
    %25 = arith.addf %24, %19 : vector<16x128xf32>
    %26 = arith.mulf %18, %25 : vector<16x128xf32>
    %27 = arith.addf %26, %22 : vector<16x128xf32>
    %c0_10 = arith.constant 0 : index
    %c0_11 = arith.constant 0 : index
    %28 = vector.load %arg4[%c0_10, %c0_11] : memref<128x16xf32, #tpu.memory_space<vmem>>, vector<128x16xf32>
    %cst_12 = arith.constant dense<0.000000e+00> : vector<16x16xf32>
    %29 = tpu.matmul %27, %28, %cst_12 {dimension_numbers = #tpu.dot_dimension_numbers<[1], [0], [0], [1], [0, 0, 1, 1], [], []>} : vector<16x128xf32>, vector<128x16xf32>, vector<16x16xf32> -> vector<16x16xf32>
    %c0_13 = arith.constant 0 : index
    %c0_14 = arith.constant 0 : index
    %30 = vector.load %arg5[%c0_13, %c0_14] : memref<1x16xf32, #tpu.memory_space<vmem>>, vector<1x16xf32>
    %31 = vector.broadcast %30 : vector<1x16xf32> to vector<16x16xf32>
    %32 = arith.addf %29, %31 : vector<16x16xf32>
    %c0_15 = arith.constant 0 : index
    %c0_16 = arith.constant 0 : index
    %33 = vector.load %arg6[%c0_15, %c0_16] : memref<16x16xf32, #tpu.memory_space<vmem>>, vector<16x16xf32>
    tpu.vector_store %arg6[%c0_15, %c0_16], %32 {strides = array<i32>} : memref<16x16xf32, #tpu.memory_space<vmem>>, vector<16x16xf32>,
    return
  }
  func.func @transform_0(%arg0: i32) -> (i32, i32) {
    %c0_i32 = arith.constant 0 : i32
    %c0_i32_0 = arith.constant 0 : i32
    return %arg0, %c0_i32 : i32, i32
  }
  func.func @transform_1(%arg0: i32) -> (i32, i32) {
    %c0_i32 = arith.constant 0 : i32
    %c0_i32_0 = arith.constant 0 : i32
    return %arg0, %c0_i32 : i32, i32
  }
  func.func @transform_2(%arg0: i32) -> (i32, i32) {
    %c0_i32 = arith.constant 0 : i32
    %c0_i32_0 = arith.constant 0 : i32
    %c0_i32_1 = arith.constant 0 : i32
    return %c0_i32, %c0_i32_0 : i32, i32
  }
  func.func @transform_3(%arg0: i32) -> (i32, i32) {
    %c0_i32 = arith.constant 0 : i32
    %c0_i32_0 = arith.constant 0 : i32
    %c0_i32_1 = arith.constant 0 : i32
    return %c0_i32, %c0_i32_0 : i32, i32
  }
  func.func @transform_4(%arg0: i32) -> (i32, i32) {
    %c0_i32 = arith.constant 0 : i32
    %c0_i32_0 = arith.constant 0 : i32
    %c0_i32_1 = arith.constant 0 : i32
    return %c0_i32, %c0_i32_0 : i32, i32
  }
  func.func @transform_5(%arg0: i32) -> (i32, i32) {
    %c0_i32 = arith.constant 0 : i32
    %c0_i32_0 = arith.constant 0 : i32
    return %arg0, %c0_i32 : i32, i32
  }
}

</mosaic_0001>

<llo_original>
// kernel: tpu_custom_call.1
$region0: #{tpu_custom_call.1}
  #allocation0 [shape = 'u32[]', space=smem, size = 0x4, offset = 0x4, fixed_abs, tag = 'smem constant byte address 0x4 - core index']
  #allocation1 [shape = 'u32[72,128]{1,0:T(1,128)}', space=vmem, size = 0x9000, scoped, tag = 'internal scratch']
  %s0 = inlined_call_operand.vmem [shape: f32[32,128], index: 0, kind: input, shape index: {}]
  %s1 = inlined_call_operand.vmem [shape: f32[32,128], index: 1, kind: input, shape index: {}]
  %s2 = inlined_call_operand.vmem [shape: f32[2,128], index: 2, kind: input, shape index: {}]
  %s3 = inlined_call_operand.vmem [shape: f32[128,16], index: 3, kind: input, shape index: {}]
  %s4 = inlined_call_operand.vmem [shape: f32[1,16], index: 4, kind: input, shape index: {}]
  %s5 = inlined_call_operand.vmem [shape: f32[32,16], index: 5, kind: output, shape index: {}]
  %s6 = sld [smem:[#allocation0]]
  $region53: #{tpu_custom_call.1} parent=0
    _
  %s8 = ssub.s32 1, %s6
  %s9 = scalar_select 0, %s8, %s6
  loop: start=0, step=1, limit=4
  $region2: #{tpu_custom_call.1} parent=0 // loop_pre_header
    _
  $region3: #{tpu_custom_call.1} parent=0 // loop_header
    %s11 = sphi 0, %s15
    %p12 = scmp.ge.s32.totalorder %s11, 4
    %s21 = sphi 0, %s23
    %s24 = sphi 0, %s21
    %s25 = sphi 0, %s24
    %s41 = sphi 0, %s25
    %s47 = sphi 0, %s49
    %s50 = sphi 0, %s47
    %s51 = sphi 0, %s50
    %s67 = sphi 0, %s51
    %s71 = sphi 0, %s71
    %s73 = sphi 0, %s71
    %s74 = sphi 0, %s73
    %s88 = sphi 0, %s74
    %s92 = sphi 0, %s92
    %s94 = sphi 0, %s92
    %s95 = sphi 0, %s94
    %s109 = sphi 0, %s95
    %s113 = sphi 0, %s113
    %s115 = sphi 0, %s113
    %s116 = sphi 0, %s115
    %s130 = sphi 0, %s116
    %s136 = sphi 0, %s138
    %s139 = sphi 0, %s136
    %s140 = sphi 0, %s139
    %s156 = sphi 0, %s140
  $region4: #{tpu_custom_call.1} parent=0 // loop_header_branch
    %14 = sbr.rel (%p12) target = $region8
  $region5: #{tpu_custom_call.1} parent=0 // loop_body
    %s16 = ssub.s32 %s11, 1
    %s17 = ssub.s32 %s11, 2
    %s18 = sadd.s32 %s11, 1
    %s19 = ssub.s32 %s11, %s18
    %p20 = scmp.eq.s32.totalorder %s19, 0
    %s22 = sadd.s32 %s21, 1
    %s23 = scalar_select %p20, %s21, %s22
    %p26 = pneg %p20
    %p27 = scmp.eq.s32.totalorder %s11, 1
    %p28 = por %p26, %p27
    %p29 = scmp.ne.s32.totalorder %s21, %s24
    %p30 = scmp.eq.s32.totalorder %s11, 0
    %p31 = por %p29, %p30
    %p32 = scmp.ne.s32.totalorder %s21, %s24
    %p33 = scmp.eq.s32.totalorder %s16, 1
    %p34 = por %p32, %p33
    %p35 = scmp.ne.s32.totalorder %s24, %s25
    %p36 = scmp.eq.s32.totalorder %s16, 0
    %p37 = por %p35, %p36
    %p38 = scmp.ne.s32.totalorder %s24, %s25
    %p39 = scmp.eq.s32.totalorder %s17, 1
    %p40 = por %p38, %p39
    %p42 = scmp.ne.s32.totalorder %s25, %s41
    %p43 = scmp.eq.s32.totalorder %s17, 0
    %p44 = por %p42, %p43
    %s45 = ssub.s32 %s11, %s18
    %p46 = scmp.eq.s32.totalorder %s45, 0
    %s48 = sadd.s32 %s47, 1
    %s49 = scalar_select %p46, %s47, %s48
    %p52 = pneg %p46
    %p53 = scmp.eq.s32.totalorder %s11, 1
    %p54 = por %p52, %p53
    %p55 = scmp.ne.s32.totalorder %s47, %s50
    %p56 = scmp.eq.s32.totalorder %s11, 0
    %p57 = por %p55, %p56
    %p58 = scmp.ne.s32.totalorder %s47, %s50
    %p59 = scmp.eq.s32.totalorder %s16, 1
    %p60 = por %p58, %p59
    %p61 = scmp.ne.s32.totalorder %s50, %s51
    %p62 = scmp.eq.s32.totalorder %s16, 0
    %p63 = por %p61, %p62
    %p64 = scmp.ne.s32.totalorder %s50, %s51
    %p65 = scmp.eq.s32.totalorder %s17, 1
    %p66 = por %p64, %p65
    %p68 = scmp.ne.s32.totalorder %s51, %s67
    %p69 = scmp.eq.s32.totalorder %s17, 0
    %p70 = por %p68, %p69
    %s72 = sadd.s32 %s71, 1
    %p75 = scmp.eq.s32.totalorder %s11, 1
    %p76 = scmp.ne.s32.totalorder %s71, %s73
    %p77 = scmp.eq.s32.totalorder %s11, 0
    %p78 = por %p76, %p77
    %p79 = scmp.ne.s32.totalorder %s71, %s73
    %p80 = scmp.eq.s32.totalorder %s16, 1
    %p81 = por %p79, %p80
    %p82 = scmp.ne.s32.totalorder %s73, %s74
    %p83 = scmp.eq.s32.totalorder %s16, 0
    %p84 = por %p82, %p83
    %p85 = scmp.ne.s32.totalorder %s73, %s74
    %p86 = scmp.eq.s32.totalorder %s17, 1
    %p87 = por %p85, %p86
    %p89 = scmp.ne.s32.totalorder %s74, %s88
    %p90 = scmp.eq.s32.totalorder %s17, 0
    %p91 = por %p89, %p90
    %s93 = sadd.s32 %s92, 1
    %p96 = scmp.eq.s32.totalorder %s11, 1
    %p97 = scmp.ne.s32.totalorder %s92, %s94
    %p98 = scmp.eq.s32.totalorder %s11, 0
    %p99 = por %p97, %p98
    %p100 = scmp.ne.s32.totalorder %s92, %s94
    %p101 = scmp.eq.s32.totalorder %s16, 1
    %p102 = por %p100, %p101
    %p103 = scmp.ne.s32.totalorder %s94, %s95
    %p104 = scmp.eq.s32.totalorder %s16, 0
    %p105 = por %p103, %p104
    %p106 = scmp.ne.s32.totalorder %s94, %s95
    %p107 = scmp.eq.s32.totalorder %s17, 1
    %p108 = por %p106, %p107
    %p110 = scmp.ne.s32.totalorder %s95, %s109
    %p111 = scmp.eq.s32.totalorder %s17, 0
    %p112 = por %p110, %p111
    %s114 = sadd.s32 %s113, 1
    %p117 = scmp.eq.s32.totalorder %s11, 1
    %p118 = scmp.ne.s32.totalorder %s113, %s115
    %p119 = scmp.eq.s32.totalorder %s11, 0
    %p120 = por %p118, %p119
    %p121 = scmp.ne.s32.totalorder %s113, %s115
    %p122 = scmp.eq.s32.totalorder %s16, 1
    %p123 = por %p121, %p122
    %p124 = scmp.ne.s32.totalorder %s115, %s116
    %p125 = scmp.eq.s32.totalorder %s16, 0
    %p126 = por %p124, %p125
    %p127 = scmp.ne.s32.totalorder %s115, %s116
    %p128 = scmp.eq.s32.totalorder %s17, 1
    %p129 = por %p127, %p128
    %p131 = scmp.ne.s32.totalorder %s116, %s130
    %p132 = scmp.eq.s32.totalorder %s17, 0
    %p133 = por %p131, %p132
    %s134 = ssub.s32 %s11, %s18
    %p135 = scmp.eq.s32.totalorder %s134, 0
    %s137 = sadd.s32 %s136, 1
    %s138 = scalar_select %p135, %s136, %s137
    %p141 = pneg %p135
    %p142 = scmp.eq.s32.totalorder %s11, 1
    %p143 = por %p141, %p142
    %p144 = scmp.ne.s32.totalorder %s136, %s139
    %p145 = scmp.eq.s32.totalorder %s11, 0
    %p146 = por %p144, %p145
    %p147 = scmp.ne.s32.totalorder %s136, %s139
    %p148 = scmp.eq.s32.totalorder %s16, 1
    %p149 = por %p147, %p148
    %p150 = scmp.ne.s32.totalorder %s139, %s140
    %p151 = scmp.eq.s32.totalorder %s16, 0
    %p152 = por %p150, %p151
    %p153 = scmp.ne.s32.totalorder %s139, %s140
    %p154 = scmp.eq.s32.totalorder %s17, 1
    %p155 = por %p153, %p154
    %p157 = scmp.ne.s32.totalorder %s140, %s156
    %p158 = scmp.eq.s32.totalorder %s17, 0
    %p159 = por %p157, %p158
    %p160 = scmp.le.s32.totalorder 1, %s11
    %p161 = scmp.lt.s32.totalorder %s11, 3
    %p162 = pnand %p160, %p161
    %p163 = pneg %p162
    // Predicated region
    $region9: #{tpu_custom_call.1} parent=5 // pred_check
      _
    $region10: #{tpu_custom_call.1} parent=5 // pred_check_branch
      %165 = sbr.rel (%p162) target = $region12
    $region11: #{tpu_custom_call.1} parent=5 // pred_region
      %s166 = ssub.s32 %s11, 1
      // Predicated region
      $region13: #{tpu_custom_call.1} parent=11 // pred_check
        %p167 = pneg %p84
      $region14: #{tpu_custom_call.1} parent=11 // pred_check_branch
        %169 = sbr.rel (%p167) target = $region16
      $region15: #{tpu_custom_call.1} parent=11 // pred_region
        _
      $region16: #{tpu_custom_call.1} parent=11 // pred_fallthru
        _
      // Predicated region
      $region17: #{tpu_custom_call.1} parent=11 // pred_check
        %p170 = pneg %p105
      $region18: #{tpu_custom_call.1} parent=11 // pred_check_branch
        %172 = sbr.rel (%p170) target = $region20
      $region19: #{tpu_custom_call.1} parent=11 // pred_region
        _
      $region20: #{tpu_custom_call.1} parent=11 // pred_fallthru
        _
      // Predicated region
      $region21: #{tpu_custom_call.1} parent=11 // pred_check
        %p173 = pneg %p126
      $region22: #{tpu_custom_call.1} parent=11 // pred_check_branch
        %175 = sbr.rel (%p173) target = $region24
      $region23: #{tpu_custom_call.1} parent=11 // pred_region
        _
      $region24: #{tpu_custom_call.1} parent=11 // pred_fallthru
        _
    $region12: #{tpu_custom_call.1} parent=5 // pred_fallthru
      _
    %p176 = scmp.lt.s32.totalorder %s11, 2
    // Predicated region
    $region25: #{tpu_custom_call.1} parent=5 // pred_check
      %p177 = pneg %p176
    $region26: #{tpu_custom_call.1} parent=5 // pred_check_branch
      %179 = sbr.rel (%p177) target = $region28
    $region27: #{tpu_custom_call.1} parent=5 // pred_region
      // Predicated region
      $region29: #{tpu_custom_call.1} parent=27 // pred_check
        %p180 = pneg %p31
      $region30: #{tpu_custom_call.1} parent=27 // pred_check_branch
        %182 = sbr.rel (%p180) target = $region32
      $region31: #{tpu_custom_call.1} parent=27 // pred_region
        %s183 = smul.u32 2, %s11
        %p184 = scmp.lt.s32.totalorder %s183, 3
        %s185 = scalar_select %p184, %s183, 3
        %s186 = smul.addr %s185, 8
        %s187 = scalar_lea.vmem %s0, %s186
        %s188 = smul.u32 2, %s11
      $region32: #{tpu_custom_call.1} parent=27 // pred_fallthru
        _
      // Predicated region
      $region33: #{tpu_custom_call.1} parent=27 // pred_check
        %p189 = pneg %p57
      $region34: #{tpu_custom_call.1} parent=27 // pred_check_branch
        %191 = sbr.rel (%p189) target = $region36
      $region35: #{tpu_custom_call.1} parent=27 // pred_region
        %s192 = smul.u32 2, %s11
        %p193 = scmp.lt.s32.totalorder %s192, 3
        %s194 = scalar_select %p193, %s192, 3
        %s195 = smul.addr %s194, 8
        %s196 = scalar_lea.vmem %s1, %s195
        %s197 = smul.u32 2, %s11
      $region36: #{tpu_custom_call.1} parent=27 // pred_fallthru
        _
    $region28: #{tpu_custom_call.1} parent=5 // pred_fallthru
      _
    %p198 = scmp.le.s32.totalorder 1, %s11
    %p199 = scmp.lt.s32.totalorder %s11, 3
    %p200 = pnand %p198, %p199
    %p201 = pneg %p200
    // Predicated region
    $region37: #{tpu_custom_call.1} parent=5 // pred_check
      _
    $region38: #{tpu_custom_call.1} parent=5 // pred_check_branch
      %203 = sbr.rel (%p200) target = $region40
    $region39: #{tpu_custom_call.1} parent=5 // pred_region
      %s204 = ssub.s32 %s11, 1
      %s205 = smul.u32 2, %s16
      %p206 = scmp.lt.s32.totalorder %s205, 3
      %s207 = scalar_select %p206, %s205, 3
      %s208 = smul.addr %s207, 8
      %s209 = scalar_lea.vmem %s0, %s208
      %p210 = pneg %p37
      %p211 = pneg %p34
      %s212 = smul.u32 2, %s16
      %p213 = scmp.lt.s32.totalorder %s212, 3
      %s214 = scalar_select %p213, %s212, 3
      %s215 = smul.addr %s214, 8
      %s216 = scalar_lea.vmem %s1, %s215
      %p217 = pneg %p63
      %p218 = pneg %p60
      %p219 = pneg %p84
      %p220 = pneg %p81
      %p221 = pneg %p105
      %p222 = pneg %p102
      %p223 = pneg %p126
      %p224 = pneg %p123
      %p225 = pneg %p152
      %p226 = pneg %p149
      %s227 = smul.u32 2, %s16
      %p228 = scmp.lt.s32.totalorder %s227, 3
      %s229 = scalar_select %p228, %s227, 3
      %s230 = smul.addr %s229, 8
      %s231 = scalar_lea.vmem %s5, %s230
      %s232 = smul.u32 2, %s16
      %p233 = scmp.lt.s32.totalorder %s232, 3
      %s234 = scalar_select %p233, %s232, 3
      %s235 = smul.addr %s234, 8
      %s236 = scalar_lea.vmem %s0, %s235
      %s237 = smul.u32 2, %s16
      %s238 = smul.u32 2, %s16
      %p239 = scmp.lt.s32.totalorder %s238, 3
      %s240 = scalar_select %p239, %s238, 3
      %s241 = smul.addr %s240, 8
      %s242 = scalar_lea.vmem %s1, %s241
      %s243 = smul.u32 2, %s16
      %s244 = smul.u32 2, %s16
      %p245 = scmp.lt.s32.totalorder %s244, 3
      %s246 = scalar_select %p245, %s244, 3
      %s247 = smul.addr %s246, 8
      %s248 = scalar_lea.vmem %s5, %s247
      %s249 = smul.u32 2, %s16
      %v250 = vld [vmem:[%s236] sm:$0xff]
      %v251 = vld [vmem:[%s236 + $0x8] sm:$0xff]
      %252 = vadd.xlane.f32.xlu0 %v250
      %v253 = vpop.xlane.xlu0 %252
      %254 = vadd.xlane.f32.xlu0 %v251
      %v255 = vpop.xlane.xlu0 %254
      %v256 = vrcp.pop 128.0
      %v257 = vmul.f32 128.0, %v256
      %v258 = vsub.f32 1.0, %v257
      %v259 = vmul.f32 %v256, %v258
      %v260 = vadd.f32 %v256, %v259
      %vm261 = vweird.f32 %v256
      %v262 = vsel %vm261, %v256, %v260
      %v263 = vmul.f32 %v253, %v262
      %v264 = vmul.f32 %v255, %v262
      %v265 = vmul.f32 %v250, %v250
      %v266 = vmul.f32 %v251, %v251
      %267 = vadd.xlane.f32.xlu0 %v265
      %v268 = vpop.xlane.xlu0 %267
      %269 = vadd.xlane.f32.xlu0 %v266
      %v270 = vpop.xlane.xlu0 %269
      %v271 = vmul.f32 %v268, %v262
      %v272 = vmul.f32 %v270, %v262
      %v273 = vmul.f32 %v263, %v263
      %v274 = vmul.f32 %v264, %v264
      %v275 = vsub.f32 %v271, %v273
      %v276 = vsub.f32 %v272, %v274
      %v277 = vsub.f32 %v250, %v263
      %v278 = vsub.f32 %v251, %v264
      %v279 = vadd.f32 %v275, 1e-06
      %v280 = vadd.f32 %v276, 1e-06
      %v281 = vrsqrt.pop %v279
      %v282 = vmul.f32 %v281, %v279
      %v283 = vmul.f32 %v282, %v281
      %v284 = vmul.f32 0.5, %v283
      %v285 = vsub.f32 1.5, %v284
      %v286 = vmul.f32 %v281, %v285
      %vm287 = vweird.f32 %v279
      %vm288 = vweird.f32 %v281
      %vm289 = vmor %vm287, %vm288
      %v290 = vsel %vm289, %v281, %v286
      %v291 = vrsqrt.pop %v280
      %v292 = vmul.f32 %v291, %v280
      %v293 = vmul.f32 %v292, %v291
      %v294 = vmul.f32 0.5, %v293
      %v295 = vsub.f32 1.5, %v294
      %v296 = vmul.f32 %v291, %v295
      %vm297 = vweird.f32 %v280
      %vm298 = vweird.f32 %v291
      %vm299 = vmor %vm297, %vm298
      %v300 = vsel %vm299, %v291, %v296
      %v301 = vmul.f32 %v277, %v290
      %v302 = vmul.f32 %v278, %v300
      %v303 = vld [vmem:[%s242] sm:$0xff]
      %v304 = vld [vmem:[%s242 + $0x8] sm:$0xff]
      %v305 = vld [vmem:[%s2] sm:$0x1]
      %v306 = vperm.slane %v305, 0
      %v307 = vadd.f32 %v306, %v303
      %v308 = vadd.f32 %v306, %v304
      %v309 = vld [vmem:[%s2 + $0x1] sm:$0x1]
      %v310 = vperm.slane %v309, 0
      %v311 = vadd.f32 %v310, %v303
      %v312 = vadd.f32 %v310, %v304
      %v313 = vmul.f32 %v301, %v311
      %v314 = vmul.f32 %v302, %v312
      %v315 = vadd.f32 %v313, %v307
      %v316 = vadd.f32 %v314, %v308
      %v317 = vld [vmem:[%s3] sm:$0xff]
      %v318 = vld [vmem:[%s3 + $0x8] sm:$0xff]
      %v319 = vld [vmem:[%s3 + $0x10] sm:$0xff]
      %v320 = vld [vmem:[%s3 + $0x18] sm:$0xff]
      %v321 = vld [vmem:[%s3 + $0x20] sm:$0xff]
      %v322 = vld [vmem:[%s3 + $0x28] sm:$0xff]
      %v323 = vld [vmem:[%s3 + $0x30] sm:$0xff]
      %v324 = vld [vmem:[%s3 + $0x38] sm:$0xff]
      %v325 = vld [vmem:[%s3 + $0x40] sm:$0xff]
      %v326 = vld [vmem:[%s3 + $0x48] sm:$0xff]
      %v327 = vld [vmem:[%s3 + $0x50] sm:$0xff]
      %v328 = vld [vmem:[%s3 + $0x58] sm:$0xff]
      %v329 = vld [vmem:[%s3 + $0x60] sm:$0xff]
      %v330 = vld [vmem:[%s3 + $0x68] sm:$0xff]
      %v331 = vld [vmem:[%s3 + $0x70] sm:$0xff]
      %v332 = vld [vmem:[%s3 + $0x78] sm:$0xff]
      %v333 = vld [vmem:[%s4] sm:$0x1]
      %v335 = vperm.slane %v333, 0
      %337 = vmatpush.msra.mxu0 %v332
      %338 = vmatpush.msra.mxu0 %v331
      %339 = vmatpush.msra.mxu0 %v330
      %340 = vmatpush.msra.mxu0 %v329
      %341 = vmatpush.msra.mxu0 %v328
      %342 = vmatpush.msra.mxu0 %v327
      %343 = vmatpush.msra.mxu0 %v326
      %344 = vmatpush.msra.mxu0 %v325
      %345 = vmatpush.msra.mxu0 %v324
      %346 = vmatpush.msra.mxu0 %v323
      %347 = vmatpush.msra.mxu0 %v322
      %348 = vmatpush.msra.mxu0 %v321
      %349 = vmatpush.msra.mxu0 %v320
      %350 = vmatpush.msra.mxu0 %v319
      %351 = vmatpush.msra.mxu0 %v318
      %352 = vmatpush.msra.mxu0 %v317
      %353 = vmatmul.f32.gmra.mxu0 %v315
      %v354 = vpop.f32.mrf.mxu0
      %v355 = vadd.f32 %v335, %v354
      %356 = vmatmul.f32.gmra.mxu0 %v316
      %v357 = vpop.f32.mrf.mxu0
      %v358 = vadd.f32 %v335, %v357
      %359 = vdwg.mxu0
      %vm360 = vcmask 130048
      %361 = vst.msk [vmem:[%s248] sm:$0xff] %vm360, %v355
      %362 = vst.msk [vmem:[%s248 + $0x8] sm:$0xff] %vm360, %v358
      %s363 = smul.u32 2, %s16
      %p364 = scmp.lt.s32.totalorder %s363, 3
      %s365 = scalar_select %p364, %s363, 3
      %s366 = smul.addr %s365, 8
      %s367 = scalar_lea.vmem %s5, %s366
      // Predicated region
      $region41: #{tpu_custom_call.1} parent=39 // pred_check
        %p368 = pneg %p149
      $region42: #{tpu_custom_call.1} parent=39 // pred_check_branch
        %370 = sbr.rel (%p368) target = $region44
      $region43: #{tpu_custom_call.1} parent=39 // pred_region
        %s371 = smul.u32 2, %s16
      $region44: #{tpu_custom_call.1} parent=39 // pred_fallthru
        _
    $region40: #{tpu_custom_call.1} parent=5 // pred_fallthru
      _
    %p372 = scmp.le.s32.totalorder 2, %s11
    // Predicated region
    $region45: #{tpu_custom_call.1} parent=5 // pred_check
      %p373 = pneg %p372
    $region46: #{tpu_custom_call.1} parent=5 // pred_check_branch
      %375 = sbr.rel (%p373) target = $region48
    $region47: #{tpu_custom_call.1} parent=5 // pred_region
      %s376 = ssub.s32 %s11, 2
      // Predicated region
      $region49: #{tpu_custom_call.1} parent=47 // pred_check
        %p377 = pneg %p155
      $region50: #{tpu_custom_call.1} parent=47 // pred_check_branch
        %379 = sbr.rel (%p377) target = $region52
      $region51: #{tpu_custom_call.1} parent=47 // pred_region
        %s380 = smul.u32 2, %s17
        %p381 = scmp.lt.s32.totalorder %s380, 3
        %s382 = scalar_select %p381, %s380, 3
        %s383 = smul.addr %s382, 8
        %s384 = scalar_lea.vmem %s5, %s383
      $region52: #{tpu_custom_call.1} parent=47 // pred_fallthru
        _
    $region48: #{tpu_custom_call.1} parent=5 // pred_fallthru
      _
  $region6: #{tpu_custom_call.1} parent=0 // loop_footer
    %s15 = sadd.s32 1, %s11
  $region7: #{tpu_custom_call.1} parent=0 // loop_footer_branch
    %10 = sbr.rel target = $region3
  $region8: #{tpu_custom_call.1} parent=0 // loop_exit
    _

</llo_original>
